<compile_context>
chip_gen: v5e
topology: v5e:2x2
jax: 0.10.0
libtpu: 0.0.40
codegen_flags: <defaults>
</compile_context>

<pallas_src>
import jax
import jax.numpy as jnp
from jax.experimental import pallas as pl
from jax.experimental.pallas import tpu as pltpu

LANES = 128
_SMALL_M_MAX = 4096      # at/below this: single full-block call, no grid
_TILE_ROWS = 1024        # gridded path: (1024, 128) f32 tile = 512 KiB


def _linear_kernel(w_ref, b_ref, x_ref, o_ref):
    # w_ref, b_ref: (1, 1) SMEM scalars.  x_ref / o_ref: VMEM tiles.
    # Pure VPU broadcasted FMA in f32 (keep off the MXU for K=N=1).
    o_ref[...] = x_ref[...] * w_ref[0, 0] + b_ref[0, 0]


def _linear_small(x_col, w_smem, b_smem):
    """Single-dispatch path for small M: free (M,1)->(1,M) reshape in/out."""
    M = x_col.shape[0]
    x_row = x_col.reshape(1, M)           # contiguous reshape, lane-major slab
    out_row = pl.pallas_call(
        _linear_kernel,
        out_shape=jax.ShapeDtypeStruct((1, M), x_col.dtype),
        in_specs=[
            pl.BlockSpec(memory_space=pltpu.MemorySpace.SMEM),   # weight
            pl.BlockSpec(memory_space=pltpu.MemorySpace.SMEM),   # bias
            pl.BlockSpec(memory_space=pltpu.MemorySpace.VMEM),   # x slab
        ],
        out_specs=pl.BlockSpec(memory_space=pltpu.MemorySpace.VMEM),
    )(w_smem, b_smem, x_row)
    return out_row.reshape(M, 1)          # contiguous reshape back


def _linear_large(x_col, w_smem, b_smem):
    """Scaling path: lane-dense (rows,128) slab, gridded + double-buffered."""
    M = x_col.shape[0]
    block = _TILE_ROWS * LANES
    M_pad = ((M + block - 1) // block) * block
    rows = M_pad // LANES
    x_slab = jnp.pad(x_col.reshape(M), (0, M_pad - M)).reshape(rows, LANES)
    out_slab = pl.pallas_call(
        _linear_kernel,
        out_shape=jax.ShapeDtypeStruct((rows, LANES), x_col.dtype),
        grid=(rows // _TILE_ROWS,),
        in_specs=[
            pl.BlockSpec(memory_space=pltpu.MemorySpace.SMEM),   # weight
            pl.BlockSpec(memory_space=pltpu.MemorySpace.SMEM),   # bias
            pl.BlockSpec((_TILE_ROWS, LANES), lambda i: (i, 0)),  # x tile
        ],
        out_specs=pl.BlockSpec((_TILE_ROWS, LANES), lambda i: (i, 0)),
        compiler_params=pltpu.CompilerParams(
            dimension_semantics=("parallel",)),   # shards rows over v7x's 2 TCs
    )(w_smem, b_smem, x_slab)
    # Padded lanes hold `bias`, not zero — must slice before returning.
    return out_slab.reshape(M_pad)[:M].reshape(M, 1)


def linear_pallas(x, weight, bias):
    """y = x @ weight.T + bias  (torch.nn.Linear(1, 1) semantics)."""
    M, K = x.shape
    N, K2 = weight.shape
    assert K == K2 == 1 and N == 1, "kernel is specialized for Linear(1, 1)"
    w_smem = weight.reshape(1, 1).astype(x.dtype)
    b_smem = bias.reshape(1, 1).astype(x.dtype)
    if M <= _SMALL_M_MAX:
        return _linear_small(x, w_smem, b_smem)
    return _linear_large(x, w_smem, b_smem)


class MyLinear:
    """JAX/Pallas port of the PyTorch MyLinear module (nn.Linear(1, 1))."""

    def __init__(self, key):
        in_features, out_features = 1, 1
        # torch.nn.Linear default init: U(-1/sqrt(fan_in), 1/sqrt(fan_in))
        bound = 1.0 / (in_features ** 0.5)
        k_w, k_b = jax.random.split(key)
        self.weight = jax.random.uniform(
            k_w, (out_features, in_features), jnp.float32, -bound, bound)
        self.bias = jax.random.uniform(
            k_b, (out_features,), jnp.float32, -bound, bound)

    def __call__(self, x):
        return linear_pallas(x, self.weight, self.bias)


if __name__ == "__main__":
    key = jax.random.PRNGKey(0)
    k_x, k_params = jax.random.split(key)

    # Matches the script: x = torch.rand([500, 1])
    x = jax.random.uniform(k_x, (500, 1), jnp.float32)

    model = MyLinear(k_params)
    out = model(x)
    out = jax.block_until_ready(out)

    # Reference check in plain JAX
    ref = x @ model.weight.T + model.bias
    assert out.shape == (500, 1)
    assert jnp.allclose(out, ref, atol=1e-5, rtol=1e-5)

    print("KERNEL_OK")
</pallas_src>

<mosaic_0001>
module attributes {stable_mosaic.version = 11 : i64} {
  func.func @_linear_kernel(%arg0: memref<1x1xf32, #tpu.memory_space<smem>>, %arg1: memref<1x1xf32, #tpu.memory_space<smem>>, %arg2: memref<1x500xf32, #tpu.memory_space<vmem>>, %arg3: memref<1x500xf32, #tpu.memory_space<vmem>>) attributes {dimension_semantics = [], scalar_prefetch = 0 : i64, scratch_operands = 0 : i64, tpu.core_type = #tpu.core_type<tc>} {
    %c0 = arith.constant 0 : index
    %c0_0 = arith.constant 0 : index
    %0 = vector.load %arg2[%c0, %c0_0] : memref<1x500xf32, #tpu.memory_space<vmem>>, vector<1x500xf32>
    %c0_1 = arith.constant 0 : index
    %c0_2 = arith.constant 0 : index
    %1 = memref.load %arg0[%c0_1, %c0_2] : memref<1x1xf32, #tpu.memory_space<smem>>
    %2 = vector.broadcast %1 : f32 to vector<1x500xf32>
    %3 = arith.mulf %0, %2 : vector<1x500xf32>
    %c0_3 = arith.constant 0 : index
    %c0_4 = arith.constant 0 : index
    %4 = memref.load %arg1[%c0_3, %c0_4] : memref<1x1xf32, #tpu.memory_space<smem>>
    %5 = vector.broadcast %4 : f32 to vector<1x500xf32>
    %6 = arith.addf %3, %5 : vector<1x500xf32>
    %c0_5 = arith.constant 0 : index
    %c0_6 = arith.constant 0 : index
    %7 = vector.load %arg3[%c0_5, %c0_6] : memref<1x500xf32, #tpu.memory_space<vmem>>, vector<1x500xf32>
    tpu.vector_store %arg3[%c0_5, %c0_6], %6 {strides = array<i32>} : memref<1x500xf32, #tpu.memory_space<vmem>>, vector<1x500xf32>,
    return
  }
}

</mosaic_0001>

<llo_original>
// kernel: tpu_custom_call.1
$region0: #{tpu_custom_call.1}
  #allocation0 [shape = 'u32[]', space=smem, size = 0x4, offset = 0x4, fixed_abs, tag = 'smem constant byte address 0x4 - core index']
  #allocation1 [shape = 'u32[72,128]{1,0:T(1,128)}', space=vmem, size = 0x9000, scoped, tag = 'internal scratch']
  #allocation2 [shape = 'f32[1,1]{1,0:T(1,128)S(6)}', space=smem, size = 0x200, scoped, tag = 'scoped memory for tpu_custom_call.1']
  #allocation3 [shape = 'f32[1,1]{1,0:T(1,128)S(6)}', space=smem, size = 0x200, scoped, tag = 'scoped memory for tpu_custom_call.1']
  %s0 = inlined_call_operand.<no memory space> [shape: f32[1,1], index: 0, kind: input, shape index: {}]
  %s1 = inlined_call_operand.<no memory space> [shape: f32[1,1], index: 1, kind: input, shape index: {}]
  %s2 = inlined_call_operand.vmem [shape: f32[1,500], index: 2, kind: input, shape index: {}]
  %s3 = inlined_call_operand.hbm [shape: f32[1,500], index: 3, kind: output, shape index: {}]
  %s4 = sld [smem:[#allocation0]]
  $region22: #{tpu_custom_call.1} parent=0
    _
  %s6 = ssub.s32 1, %s4
  %s7 = scalar_select 0, %s6, %s4
  %8 = sst [smem:[#allocation2]] %s0
  %9 = sst [smem:[#allocation3]] %s1
  $region1: #{tpu_custom_call.1} parent=0
    #allocation4 [shape = 'u8[2048]{0}', space=vmem, size = 0x800, scoped, tag = 'output window, operand 0, single buffered']
    #allocation5 [shape = 's32[1]{0}', space=sflag, size = 0x4, scoped, tag = 'scoped memory for tpu_custom_call.1']
    %10 = vsyncpa [#allocation5], 0
    // Predicated region
    $region2: #{tpu_custom_call.1} parent=1 // pred_check
      _
    $region3: #{tpu_custom_call.1} parent=1 // pred_check_branch
      %12 = sbr.rel (0) target = $region5
    $region4: #{tpu_custom_call.1} parent=1 // pred_region
      _
    $region5: #{tpu_custom_call.1} parent=1 // pred_fallthru
      _
    // Predicated region
    $region6: #{tpu_custom_call.1} parent=1 // pred_check
      _
    $region7: #{tpu_custom_call.1} parent=1 // pred_check_branch
      %14 = sbr.rel (0) target = $region9
    $region8: #{tpu_custom_call.1} parent=1 // pred_region
      _
    $region9: #{tpu_custom_call.1} parent=1 // pred_fallthru
      _
    // Predicated region
    $region10: #{tpu_custom_call.1} parent=1 // pred_check
      _
    $region11: #{tpu_custom_call.1} parent=1 // pred_check_branch
      %16 = sbr.rel (0) target = $region13
    $region12: #{tpu_custom_call.1} parent=1 // pred_region
      _
    $region13: #{tpu_custom_call.1} parent=1 // pred_fallthru
      _
    %v17 = vld [vmem:[%s2] sm:$0xf]
    %s18 = sld [smem:[#allocation2]]
    %v19 = vstv %s18
    %v20 = vmul.f32 %v17, %v19
    %s21 = sld [smem:[#allocation3]]
    %v22 = vstv %s21
    %v23 = vadd.f32 %v20, %v22
    %v24 = vlaneseq
    %vm25 = vcmp.ge.s32.totalorder %v24, 0
    %vm26 = vcmp.lt.s32.totalorder %v24, 500
    %vm27 = vmand %vm25, %vm26
    %28 = vst.msk [vmem:[#allocation4] sm:$0xf] %vm27, %v23
    // Predicated region
    $region14: #{tpu_custom_call.1} parent=1 // pred_check
      _
    $region15: #{tpu_custom_call.1} parent=1 // pred_check_branch
      %30 = sbr.rel (0) target = $region17
    $region16: #{tpu_custom_call.1} parent=1 // pred_region
      %32 = vsyncadd [#allocation5], 0
      %s34 = sshll.u32 [#allocation4], 4
      %s35 = int_to_ptr.vmem [resolvable:$true] %s34
      %s36 = sshll.u32 %s3, 4
      %s37 = int_to_ptr.hbm [resolvable:$true] %s36
      %39 = dma.vmem_to_hbm [thread:$0]  %s35, 64, %s37, [#allocation5]
    $region17: #{tpu_custom_call.1} parent=1 // pred_fallthru
      _
    // Predicated region
    $region18: #{tpu_custom_call.1} parent=1 // pred_check
      _
    $region19: #{tpu_custom_call.1} parent=1 // pred_check_branch
      %41 = sbr.rel (0) target = $region21
    $region20: #{tpu_custom_call.1} parent=1 // pred_region
      %43 = dma.done [#allocation5], 64
    $region21: #{tpu_custom_call.1} parent=1 // pred_fallthru
      _
    %44 = vsyncpa [#allocation5], 1

</llo_original>
